<compile_context>
chip_gen: v6e
topology: v6e:2x2x1
jax: 0.10.0
libtpu: 0.0.40
codegen_flags: <defaults>
</compile_context>

<pallas_src>
import numpy as np
import jax
import jax.numpy as jnp
from jax.experimental import pallas as pl
from jax.experimental.pallas import tpu as pltpu


# ----------------------------------------------------------------------------
# Synthetic env factorization (stand-in for get_env_factorization)
# ----------------------------------------------------------------------------
def get_env_factorization(domain, skill_dim, skill_channel):
    # Deterministic, synthetic partitions consistent with the module's usage.
    assert domain == "particle"
    obs_partition = [4, 6, 2]                        # per-factor obs dims
    per_channel = skill_dim // skill_channel
    skill_partition = [per_channel] * skill_channel  # per-channel skill dims
    action_partition = [2]
    return obs_partition, skill_partition, action_partition


# ----------------------------------------------------------------------------
# Pallas kernel: single fused block-diagonal Linear  (x_cat @ W_blk + b_cat)
# ----------------------------------------------------------------------------
def _block_linear_kernel(x_ref, w_ref, b_ref, o_ref):
    # x_ref: (B, K_sum)   w_ref: (K_sum, F*H)   b_ref: (1, F*H)   o_ref: (B, F*H)
    y = jnp.dot(x_ref[...], w_ref[...], preferred_element_type=jnp.float32)
    o_ref[...] = (y + b_ref[...]).astype(o_ref.dtype)


def state_partition_tokens(x_cat, W_blk, b_cat, num_factors, embed):
    """
    x_cat : (B, K_sum)    concatenated factor inputs
    W_blk : (K_sum, F*H)  block-diagonal packed per-factor weights
    b_cat : (1, F*H)      concatenated per-factor biases
    returns (B, F, H)
    """
    B, _ = x_cat.shape
    FH = W_blk.shape[-1]
    out = pl.pallas_call(
        _block_linear_kernel,
        out_shape=jax.ShapeDtypeStruct((B, FH), x_cat.dtype),
        # No grid: everything fits in VMEM thousands of times over; full-array
        # VMEM blocks avoid any per-step pipeline overhead / tiny DMAs.
        in_specs=[
            pl.BlockSpec(memory_space=pltpu.MemorySpace.VMEM),
            pl.BlockSpec(memory_space=pltpu.MemorySpace.VMEM),
            pl.BlockSpec(memory_space=pltpu.MemorySpace.VMEM),
        ],
        out_specs=pl.BlockSpec(memory_space=pltpu.MemorySpace.VMEM),
    )(x_cat, W_blk, b_cat)
    # Lane-dense (B, F*H) store in-kernel; cheap metadata reshape here matches
    # torch.stack(dim=-2) because factor i owns columns [i*H, (i+1)*H).
    return out.reshape(B, num_factors, embed)


# ----------------------------------------------------------------------------
# Module wrapper (parameter setup / packing in plain JAX)
# ----------------------------------------------------------------------------
class StatePartitionTokensPallas:
    def __init__(self, skill_dim, skill_channel, domain="particle",
                 extra_embedding_size=32, key=None):
        self.extra_embedding_size = extra_embedding_size
        (self.obs_partition,
         self.skill_partition,
         self.action_partition) = get_env_factorization(domain, skill_dim, skill_channel)
        self.partitions = list(self.obs_partition) + list(self.skill_partition)
        self.num_factors = len(self.partitions)
        H = extra_embedding_size
        F = self.num_factors
        self.K_sum = int(np.sum(self.partitions))
        # Per-factor column offsets = cumsum of TRUE sizes (not a padded K).
        self.offsets = np.concatenate([[0], np.cumsum(self.partitions)]).astype(int)

        # Deterministic parameter init (one Linear(k_i, H) per factor),
        # packed once into a block-diagonal weight and concatenated bias.
        key = jax.random.PRNGKey(42) if key is None else key
        W_blk = jnp.zeros((self.K_sum, F * H), jnp.float32)
        self.W_list, self.b_list = [], []
        for i, k in enumerate(self.partitions):
            kw, kb, key = jax.random.split(key, 3)
            bound = 1.0 / np.sqrt(k)
            w_i = jax.random.uniform(kw, (k, H), jnp.float32, -bound, bound)
            b_i = jax.random.uniform(kb, (H,), jnp.float32, -bound, bound)
            off = self.offsets[i]
            W_blk = W_blk.at[off:off + k, i * H:(i + 1) * H].set(w_i)
            self.W_list.append(w_i)
            self.b_list.append(b_i)
        self.W_blk = W_blk                                        # (K_sum, F*H)
        self.b_cat = jnp.concatenate(self.b_list).reshape(1, F * H)

        # TODO(synk): if B ever becomes large in production, add a B-tiled grid
        # (tiles of 128/256 rows, dimension_semantics=("parallel",)) and a bf16
        # cast of x/W; at B=2 a single full-VMEM invocation is optimal.

    def pack_inputs(self, obs_list):
        # Single concatenate along the feature dim; block-diagonal W makes
        # zero-padding unnecessary.
        return jnp.concatenate(
            [x.astype(jnp.float32) for x in obs_list], axis=-1)   # (B, K_sum)

    def __call__(self, obs_list):
        x_cat = self.pack_inputs(obs_list)
        return state_partition_tokens(x_cat, self.W_blk, self.b_cat,
                                      self.num_factors, self.extra_embedding_size)

    def reference(self, obs_list):
        # Pure-JAX reference of the PyTorch forward (per-factor Linear + stack).
        outs = []
        for i, (x, k) in enumerate(zip(obs_list, self.partitions)):
            outs.append(x @ self.W_list[i] + self.b_list[i])
        return jnp.stack(outs, axis=-2)   # (B, F, H)


# ----------------------------------------------------------------------------
if __name__ == "__main__":
    B = 2
    skill_dim = 8
    skill_channel = 2
    H = 32

    module = StatePartitionTokensPallas(skill_dim, skill_channel,
                                        domain="particle",
                                        extra_embedding_size=H)

    key = jax.random.PRNGKey(0)
    obs_list = []
    for k in module.partitions:
        key, sub = jax.random.split(key)
        obs_list.append(jax.random.normal(sub, (B, k), jnp.float32))

    out = module(obs_list)
    out = jax.block_until_ready(out)

    ref = module.reference(obs_list)
    assert out.shape == (B, module.num_factors, H), out.shape
    np.testing.assert_allclose(np.asarray(out), np.asarray(ref),
                               rtol=1e-5, atol=1e-5)

    print("KERNEL_OK")
</pallas_src>

<mosaic_0001>
module attributes {stable_mosaic.version = 11 : i64} {
  func.func @_block_linear_kernel(%arg0: memref<2x20xf32, #tpu.memory_space<vmem>>, %arg1: memref<20x160xf32, #tpu.memory_space<vmem>>, %arg2: memref<1x160xf32, #tpu.memory_space<vmem>>, %arg3: memref<2x160xf32, #tpu.memory_space<vmem>>) attributes {dimension_semantics = [], scalar_prefetch = 0 : i64, scratch_operands = 0 : i64, tpu.core_type = #tpu.core_type<tc>} {
    %c0 = arith.constant 0 : index
    %c0_0 = arith.constant 0 : index
    %0 = vector.load %arg0[%c0, %c0_0] : memref<2x20xf32, #tpu.memory_space<vmem>>, vector<2x20xf32>
    %c0_1 = arith.constant 0 : index
    %c0_2 = arith.constant 0 : index
    %1 = vector.load %arg1[%c0_1, %c0_2] : memref<20x160xf32, #tpu.memory_space<vmem>>, vector<20x160xf32>
    %cst = arith.constant dense<0.000000e+00> : vector<2x160xf32>
    %2 = tpu.matmul %0, %1, %cst {dimension_numbers = #tpu.dot_dimension_numbers<[1], [0], [0], [1], [0, 0, 1, 1], [], []>} : vector<2x20xf32>, vector<20x160xf32>, vector<2x160xf32> -> vector<2x160xf32>
    %c0_3 = arith.constant 0 : index
    %c0_4 = arith.constant 0 : index
    %3 = vector.load %arg2[%c0_3, %c0_4] : memref<1x160xf32, #tpu.memory_space<vmem>>, vector<1x160xf32>
    %4 = vector.broadcast %3 : vector<1x160xf32> to vector<2x160xf32>
    %5 = arith.addf %2, %4 : vector<2x160xf32>
    %c0_5 = arith.constant 0 : index
    %c0_6 = arith.constant 0 : index
    %6 = vector.load %arg3[%c0_5, %c0_6] : memref<2x160xf32, #tpu.memory_space<vmem>>, vector<2x160xf32>
    tpu.vector_store %arg3[%c0_5, %c0_6], %5 {strides = array<i32>} : memref<2x160xf32, #tpu.memory_space<vmem>>, vector<2x160xf32>,
    return
  }
}

</mosaic_0001>

<llo_original>
// kernel: tpu_custom_call.1
$region0: #{tpu_custom_call.1}
  #allocation0 [shape = 'u32[]', space=smem, size = 0x4, offset = 0x4, fixed_abs, tag = 'smem constant byte address 0x4 - core index']
  #allocation1 [shape = 'u32[144,128]{1,0:T(1,128)}', space=vmem, size = 0x12000, scoped, tag = 'internal scratch']
  %s0 = inlined_call_operand.hbm [shape: f32[2,20], index: 0, kind: input, shape index: {}]
  %s1 = inlined_call_operand.hbm [shape: f32[20,160], index: 1, kind: input, shape index: {}]
  %s2 = inlined_call_operand.vmem [shape: f32[1,160], index: 2, kind: input, shape index: {}]
  %s3 = inlined_call_operand.hbm [shape: f32[2,160], index: 3, kind: output, shape index: {}]
  %s4 = sld [smem:[#allocation0]]
  $region30: #{tpu_custom_call.1} parent=0
    _
  %s6 = ssub.s32 1, %s4
  %s7 = scalar_select 0, %s6, %s4
  $region1: #{tpu_custom_call.1} parent=0
    #allocation2 [shape = 'u8[1024]{0}', space=vmem, size = 0x400, scoped, tag = 'input window, operand 0, single buffered']
    #allocation3 [shape = 's32[1]{0}', space=sflag, size = 0x4, scoped, tag = 'scoped memory for tpu_custom_call.1']
    #allocation4 [shape = 's32[1]{0}', space=sflag, size = 0x4, scoped, tag = 'scoped memory for tpu_custom_call.1']
    #allocation5 [shape = 'u8[24576]{0}', space=vmem, size = 0x6000, scoped, tag = 'input window, operand 1, single buffered']
    #allocation6 [shape = 's32[1]{0}', space=sflag, size = 0x4, scoped, tag = 'scoped memory for tpu_custom_call.1']
    #allocation7 [shape = 'u8[2048]{0}', space=vmem, size = 0x800, scoped, tag = 'output window, operand 0, single buffered']
    %8 = vsyncpa [#allocation3], 0
    %9 = vsyncpa [#allocation6], 0
    %10 = vsyncpa [#allocation4], 0
    // Predicated region
    $region2: #{tpu_custom_call.1} parent=1 // pred_check
      _
    $region3: #{tpu_custom_call.1} parent=1 // pred_check_branch
      %12 = sbr.rel (0) target = $region5
    $region4: #{tpu_custom_call.1} parent=1 // pred_region
      %s14 = ssub.s32 32, 32
      %15 = vsyncadd [#allocation3], %s14
      %s17 = sshll.u32 [#allocation2], 4
      %s18 = int_to_ptr.vmem [resolvable:$true] %s17
      %20 = dma.hbm_to_vmem [thread:$0]  %s0, 32, %s18, [#allocation3]
    $region5: #{tpu_custom_call.1} parent=1 // pred_fallthru
      _
    // Predicated region
    $region6: #{tpu_custom_call.1} parent=1 // pred_check
      _
    $region7: #{tpu_custom_call.1} parent=1 // pred_check_branch
      %22 = sbr.rel (0) target = $region9
    $region8: #{tpu_custom_call.1} parent=1 // pred_region
      %s24 = ssub.s32 768, 768
      %25 = vsyncadd [#allocation6], %s24
      %s26 = sshll.u32 [#allocation5], 4
      %s27 = int_to_ptr.vmem [resolvable:$true] %s26
      %32 = dma.hbm_to_vmem [thread:$0]  %s1, 768, %s27, [#allocation6], 256, 256, 16
    $region9: #{tpu_custom_call.1} parent=1 // pred_fallthru
      _
    // Predicated region
    $region10: #{tpu_custom_call.1} parent=1 // pred_check
      _
    $region11: #{tpu_custom_call.1} parent=1 // pred_check_branch
      %34 = sbr.rel (0) target = $region13
    $region12: #{tpu_custom_call.1} parent=1 // pred_region
      _
    $region13: #{tpu_custom_call.1} parent=1 // pred_fallthru
      _
    // Predicated region
    $region14: #{tpu_custom_call.1} parent=1 // pred_check
      _
    $region15: #{tpu_custom_call.1} parent=1 // pred_check_branch
      %36 = sbr.rel (0) target = $region17
    $region16: #{tpu_custom_call.1} parent=1 // pred_region
      %37 = dma.done [#allocation3], 32
    $region17: #{tpu_custom_call.1} parent=1 // pred_fallthru
      _
    // Predicated region
    $region18: #{tpu_custom_call.1} parent=1 // pred_check
      _
    $region19: #{tpu_custom_call.1} parent=1 // pred_check_branch
      %39 = sbr.rel (0) target = $region21
    $region20: #{tpu_custom_call.1} parent=1 // pred_region
      %40 = dma.done [#allocation6], 768
    $region21: #{tpu_custom_call.1} parent=1 // pred_fallthru
      _
    %v41 = vld [vmem:[#allocation2] sm:$0x3]
    %v42 = vld [vmem:[#allocation5] sm:$0xff]
    %v43 = vld [vmem:[#allocation5 + $0x8] sm:$0xff]
    %v44 = vld [vmem:[#allocation5 + $0x10] sm:$0xff]
    %v45 = vld [vmem:[#allocation5 + $0x18] sm:$0xff]
    %v46 = vld [vmem:[#allocation5 + $0x20] sm:$0xf]
    %v47 = vld [vmem:[#allocation5 + $0x28] sm:$0xf]
    %v48 = vld [vmem:[%s2] sm:$0x3]
    %v50 = vlaneseq
    %v51 = vshrl.u32 %v50, 7
    %v52 = vsub.s32 0, %v51
    %v53 = vrot.slane %v48, %v52
    %v54 = vlaneseq
    %v55 = vshrl.u32 %v54, 7
    %v56 = vsub.s32 1, %v55
    %v57 = vrot.slane %v48, %v56
    %vm60 = vcmask 162816
    %v62 = vsel %vm60, %v41, 0
    %vm64 = vcmask 1043456
    %v66 = vsel %vm64, %v46, 0
    %v69 = vsel %vm64, %v47, 0
    %71 = vmatprep.subr.mxu0 0.0
    %72 = vmatpush1.msra.mxu0 0.0
    %73 = vmatprep.subr.mxu0 0.0
    %74 = vmatpush1.msra.mxu0 0.0
    %75 = vmatprep.subr.mxu0 0.0
    %76 = vmatpush1.msra.mxu0 0.0
    %77 = vmatprep.subr.mxu0 0.0
    %78 = vmatpush1.msra.mxu0 0.0
    %79 = vmatprep.subr.mxu0 0.0
    %80 = vmatpush1.msra.mxu0 0.0
    %81 = vmatprep.subr.mxu0 0.0
    %82 = vmatpush1.msra.mxu0 0.0
    %83 = vmatprep.subr.mxu0 0.0
    %84 = vmatpush1.msra.mxu0 0.0
    %85 = vmatprep.subr.mxu0 0.0
    %86 = vmatpush1.msra.mxu0 0.0
    %87 = vmatprep.subr.mxu0 0.0
    %88 = vmatpush1.msra.mxu0 0.0
    %89 = vmatprep.subr.mxu0 0.0
    %90 = vmatpush1.msra.mxu0 0.0
    %91 = vmatprep.subr.mxu0 0.0
    %92 = vmatpush1.msra.mxu0 0.0
    %93 = vmatprep.subr.mxu0 0.0
    %94 = vmatpush1.msra.mxu0 0.0
    %95 = vmatprep.subr.mxu0 0.0
    %96 = vmatpush1.msra.mxu0 0.0
    %97 = vmatprep.subr.mxu0 %v69
    %98 = vmatpush1.msra.mxu0 %v66
    %99 = vmatprep.subr.mxu0 %v45
    %100 = vmatpush1.msra.mxu0 %v44
    %101 = vmatprep.subr.mxu0 %v43
    %102 = vmatpush1.msra.mxu0 %v42
    %103 = vmatprep.subr.mxu0 0.0
    %104 = vmatpush2.msra.mxu0 0.0
    %105 = vmatprep.subr.mxu0 0.0
    %106 = vmatpush2.msra.mxu0 0.0
    %107 = vmatprep.subr.mxu0 0.0
    %108 = vmatpush2.msra.mxu0 0.0
    %109 = vmatprep.subr.mxu0 0.0
    %110 = vmatpush2.msra.mxu0 0.0
    %111 = vmatprep.subr.mxu0 0.0
    %112 = vmatpush2.msra.mxu0 0.0
    %113 = vmatprep.subr.mxu0 0.0
    %114 = vmatpush2.msra.mxu0 0.0
    %115 = vmatprep.subr.mxu0 0.0
    %116 = vmatpush2.msra.mxu0 0.0
    %117 = vmatprep.subr.mxu0 0.0
    %118 = vmatpush2.msra.mxu0 0.0
    %119 = vmatprep.subr.mxu0 0.0
    %120 = vmatpush2.msra.mxu0 0.0
    %121 = vmatprep.subr.mxu0 0.0
    %122 = vmatpush2.msra.mxu0 0.0
    %123 = vmatprep.subr.mxu0 0.0
    %124 = vmatpush2.msra.mxu0 0.0
    %125 = vmatprep.subr.mxu0 0.0
    %126 = vmatpush2.msra.mxu0 0.0
    %127 = vmatprep.subr.mxu0 0.0
    %128 = vmatpush2.msra.mxu0 0.0
    %129 = vmatprep.subr.mxu0 0.0
    %130 = vmatpush2.msra.mxu0 0.0
    %131 = vmatprep.subr.mxu0 0.0
    %132 = vmatpush2.msra.mxu0 0.0
    %133 = vmatprep.subr.mxu0 0.0
    %134 = vmatpush2.msra.mxu0 0.0
    %135 = vmatprep.mubr.f32.mxu0 0.0
    %136 = vmatmul.mubr.f32.gmra.mxu0 %v62
    %v137 = vpop.f32.mrf.mxu0
    %v138 = vadd.f32 %v53, %v137
    %v139 = vpop.f32.mrf.mxu0
    %v140 = vadd.f32 %v57, %v139
    %141 = vdwg.mxu0
    %v144 = vcombine.low %v138, %v140
    %v146 = vunpack.c.l.s4 1983009808
    %v147 = vunpack.c.0.s8 %v146
    %v148 = vlaneseq
    %v149 = vshrl.u32 %v148, 7
    %v150 = vsub.s32 %v147, %v149
    %v151 = vrot.slane %v144, %v150
    %vm153 = vcmask 1041408
    %vm154 = vcmask 257026
    %vm155 = vmor %vm154, %vm153
    %156 = vst.msk [vmem:[#allocation7] sm:$0xf] %vm155, %v151
    // Predicated region
    $region22: #{tpu_custom_call.1} parent=1 // pred_check
      _
    $region23: #{tpu_custom_call.1} parent=1 // pred_check_branch
      %158 = sbr.rel (0) target = $region25
    $region24: #{tpu_custom_call.1} parent=1 // pred_region
      %s160 = ssub.s32 64, 64
      %161 = vsyncadd [#allocation4], %s160
      %s163 = sshll.u32 [#allocation7], 4
      %s164 = int_to_ptr.vmem [resolvable:$true] %s163
      %166 = dma.vmem_to_hbm [thread:$0]  %s164, 64, %s3, [#allocation4]
    $region25: #{tpu_custom_call.1} parent=1 // pred_fallthru
      _
    // Predicated region
    $region26: #{tpu_custom_call.1} parent=1 // pred_check
      _
    $region27: #{tpu_custom_call.1} parent=1 // pred_check_branch
      %168 = sbr.rel (0) target = $region29
    $region28: #{tpu_custom_call.1} parent=1 // pred_region
      %169 = dma.done [#allocation4], 64
    $region29: #{tpu_custom_call.1} parent=1 // pred_fallthru
      _
    %170 = vsyncpa [#allocation3], 1
    %171 = vsyncpa [#allocation6], 1
    %172 = vsyncpa [#allocation4], 1

</llo_original>
